<compile_context>
chip_gen: v7x
topology: tpu7x:2x2x1
jax: 0.10.0
libtpu: 0.0.40
codegen_flags: <defaults>
</compile_context>

<pallas_src>
import functools

import jax
import jax.numpy as jnp
from jax import lax
from jax.experimental import pallas as pl
from jax.experimental.pallas import tpu as pltpu


def _shifted_taps(xb, mL, mR, N):
    """Values at j-1 / j+1 along lanes (bf16), zeroed across batch boundaries."""
    if N % 128 == 0:
        # production / lane-aligned path: XLU rotates, essentially free next to MXU
        left = pltpu.roll(xb, shift=1, axis=1) * mL
        right = pltpu.roll(xb, shift=N - 1, axis=1) * mR
    else:
        xp = jnp.pad(xb, ((0, 0), (1, 1)))          # bf16 pad, small test shapes
        left = xp[:, 0:N] * mL
        right = xp[:, 2:N + 2] * mR
    return left, right


def _resnet_block_kernel(
    x_ref,      # (1, Kx, N) bf16  Kx = Ci (stride==1, taps built in-kernel)
                #                  or 3*Ci (stride>1, pre-built im2col taps)
    wbig_ref,   # (Mw, 3*Ci)  bf16 [conv1 folded taps ; fused 1x1 projection (if any)]
    w2_ref,     # (Co, 3*Co)  bf16 conv2 folded taps
    wfc1_ref,   # (Cr, Co)    bf16 SE fc1
    wfc2_ref,   # (Co, Cr)    bf16 SE fc2
    sb_ref,     # (Co, 8)     f32  [s1 b1 s2 b2 ssc bsc 0 0]
    msk_ref,    # (2, N)      bf16 [left-valid ; right-valid] batch-boundary masks
    pool_ref,   # (N, Bt)     bf16 per-batch average-pool matrix (1/Lout blocks)
    out_ref,    # (1, Co, N)  f32
    *, has_proj, build_taps, Ci, Co, Lout, Bt,
):
    N = Bt * Lout
    mL = msk_ref[0:1, :]                              # (1, N) bf16, 0 at batch starts
    mR = msk_ref[1:2, :]                              # (1, N) bf16, 0 at batch ends

    s1 = sb_ref[:, 0:1]
    b1 = sb_ref[:, 1:2]
    s2 = sb_ref[:, 2:3]
    b2 = sb_ref[:, 3:4]

    # ---- conv1 operand: either build the three taps in-kernel (stride==1) or
    #      use the pre-built strided im2col block ----
    if build_taps:
        xb = x_ref[0]                                 # (Ci, N) bf16
        xl, xr = _shifted_taps(xb, mL, mR, N)
        x3 = jnp.concatenate([xl, xb, xr], axis=0)    # (3*Ci, N) bf16
    else:
        x3 = x_ref[0]                                 # (3*Ci, N) bf16

    # ---- conv1 (k=3) + fused 1x1 projection shortcut: one bf16 MXU matmul ----
    res = jnp.dot(wbig_ref[...], x3,
                  preferred_element_type=jnp.float32)  # (Mw, N) f32

    # shortcut finished immediately so only a (Co, N) slab stays live downstream
    if has_proj:
        ssc = sb_ref[:, 4:5]
        bsc = sb_ref[:, 5:6]
        sc = res[Co:2 * Co] * ssc + bsc
    else:
        sc = x3[Ci:2 * Ci].astype(jnp.float32)         # identity residual (bf16-rounded)

    out1 = jnp.maximum(res[:Co] * s1 + b1, 0.0)        # (Co, N) f32  (bn1 + relu)

    # ---- conv2 (k=3, stride=1): bf16 shifted taps + boundary masks, one matmul ----
    o1b = out1.astype(jnp.bfloat16)
    left, right = _shifted_taps(o1b, mL, mR, N)
    x2 = jnp.concatenate([left, o1b, right], axis=0)   # (3*Co, N) bf16
    out2 = jnp.dot(w2_ref[...], x2,
                   preferred_element_type=jnp.float32)  # (Co, N) f32
    out2 = out2 * s2 + b2                               # bn2

    # ---- SE layer: per-batch average pool (bf16 dot), fc1+relu, fc2+sigmoid, gate ----
    y = jnp.dot(out2.astype(jnp.bfloat16), pool_ref[...],
                preferred_element_type=jnp.float32)     # (Co, Bt) f32
    h = jnp.maximum(
        jnp.dot(wfc1_ref[...], y.astype(jnp.bfloat16),
                preferred_element_type=jnp.float32), 0.0)           # (Cr, Bt)
    z = jax.nn.sigmoid(
        jnp.dot(wfc2_ref[...], h.astype(jnp.bfloat16),
                preferred_element_type=jnp.float32))                 # (Co, Bt)
    if Bt == 1:
        out2 = out2 * z                                 # broadcast over lanes
    else:
        gate = jnp.concatenate(
            [jnp.broadcast_to(z[:, b:b + 1], (Co, Lout)) for b in range(Bt)],
            axis=1)                                     # (Co, N) unrolled lane broadcast
        out2 = out2 * gate

    # ---- residual add + final relu ----
    out_ref[0] = jnp.maximum(out2 + sc, 0.0)


def resnet_block_forward(x, params, stride, *, batch_block=None):
    """x: (B, Ci, L) float32 -> (B, Co, Lout) float32."""
    B, Ci, L = x.shape
    w1 = params["w1"]                                   # (Co, Ci, 3)
    Co = w1.shape[0]
    Cr = params["wfc1"].shape[0]
    Lout = (L - 1) // stride + 1
    has_proj = (stride != 1) or (Ci != Co)
    build_taps = (stride == 1)

    # ---- pick batch_block: prefer lane-dense N (multiple of 128), keep >=2 grid
    #      steps on the "parallel" axis so both v7x TensorCores get work ----
    if batch_block is None:
        divisors = [d for d in range(1, B + 1) if B % d == 0]
        def score(d):
            n = d * Lout
            return (n % 128 == 0, B // d >= 2, n)
        batch_block = max(divisors, key=score)
    Bt = batch_block
    assert B % Bt == 0, "batch must be divisible by batch_block"
    nblk = B // Bt
    N = Bt * Lout

    # ---- input slab (bf16 MXU operand only) ----
    if build_taps:
        # plain input, batch folded into lanes; taps are built in-kernel
        xin = (x.reshape(nblk, Bt, Ci, L)
                 .transpose(0, 2, 1, 3)
                 .reshape(nblk, Ci, N)).astype(jnp.bfloat16)
        Kx = Ci
    else:
        # strided im2col (tap-major rows), bf16
        xpad = jnp.pad(x, ((0, 0), (0, 0), (1, 1)))
        taps = [xpad[:, :, k:k + (Lout - 1) * stride + 1:stride] for k in range(3)]
        xcol = jnp.concatenate(taps, axis=1)            # (B, 3*Ci, Lout)
        xin = (xcol.reshape(nblk, Bt, 3 * Ci, Lout)
                    .transpose(0, 2, 1, 3)
                    .reshape(nblk, 3 * Ci, N)).astype(jnp.bfloat16)
        Kx = 3 * Ci

    # ---- fold / fuse weights, cast MXU operands to bf16 ----
    w1f = jnp.transpose(w1, (0, 2, 1)).reshape(Co, 3 * Ci)            # (Co, 3*Ci)
    if has_proj:
        wscf = jnp.concatenate(
            [jnp.zeros((Co, Ci), jnp.float32), params["wsc"],
             jnp.zeros((Co, Ci), jnp.float32)], axis=1)               # center-tap columns only
        wbig = jnp.concatenate([w1f, wscf], axis=0)                   # (2*Co, 3*Ci)
    else:
        wbig = w1f                                                    # (Co, 3*Ci)
    wbig = wbig.astype(jnp.bfloat16)
    w2f = jnp.transpose(params["w2"], (0, 2, 1)).reshape(Co, 3 * Co).astype(jnp.bfloat16)
    wfc1 = params["wfc1"].astype(jnp.bfloat16)
    wfc2 = params["wfc2"].astype(jnp.bfloat16)
    Mw = wbig.shape[0]

    # ---- pack the six (Co,1) BN scale/bias vectors into one (Co, 8) slab ----
    if has_proj:
        cols = [params["s1"], params["b1"], params["s2"], params["b2"],
                params["ssc"], params["bsc"]]
    else:
        cols = [params["s1"], params["b1"], params["s2"], params["b2"],
                jnp.ones((Co, 1), jnp.float32), jnp.zeros((Co, 1), jnp.float32)]
    sb = jnp.concatenate(cols + [jnp.zeros((Co, 2), jnp.float32)], axis=1)   # (Co, 8)

    # ---- precomputed (grid-invariant) batch-boundary masks and SE pool matrix ----
    pos = jnp.arange(N) % Lout
    msk = jnp.stack([(pos != 0), (pos != Lout - 1)], axis=0).astype(jnp.bfloat16)   # (2, N)
    pool = (jnp.equal(jnp.arange(N)[:, None] // Lout, jnp.arange(Bt)[None, :])
            .astype(jnp.float32) / Lout).astype(jnp.bfloat16)                        # (N, Bt)

    kernel = functools.partial(
        _resnet_block_kernel, has_proj=has_proj, build_taps=build_taps,
        Ci=Ci, Co=Co, Lout=Lout, Bt=Bt)

    # ---- explicit VMEM budget (matters on v5e's 16 MiB default; capped for v7x) ----
    io_bytes = 2 * (Kx * N * 2 + Co * N * 4)                 # double-buffered in (bf16) + out (f32)
    w_bytes = (Mw * 3 * Ci + 3 * Co * Co + 2 * Cr * Co + 2 * N + N * Bt) * 2 + Co * 8 * 4
    inter_bytes = (Mw + 10 * Co) * N * 4
    vmem_limit = int(min(64 << 20, max(32 << 20, 2 * (io_bytes + w_bytes + inter_bytes))))

    full = lambda shape: pl.BlockSpec(shape, lambda i: (0, 0))

    out_blk = pl.pallas_call(
        kernel,
        out_shape=jax.ShapeDtypeStruct((nblk, Co, N), jnp.float32),
        grid=(nblk,),
        in_specs=[
            pl.BlockSpec((1, Kx, N), lambda i: (i, 0, 0)),   # x / xcol (bf16)
            full((Mw, 3 * Ci)),                              # wbig  (bf16)
            full((Co, 3 * Co)),                              # w2f   (bf16)
            full((Cr, Co)),                                  # wfc1  (bf16)
            full((Co, Cr)),                                  # wfc2  (bf16)
            full((Co, 8)),                                   # packed scale/bias (f32)
            full((2, N)),                                    # boundary masks (bf16)
            full((N, Bt)),                                   # SE pool matrix (bf16)
        ],
        out_specs=pl.BlockSpec((1, Co, N), lambda i: (i, 0, 0)),
        compiler_params=pltpu.CompilerParams(
            dimension_semantics=("parallel",),
            vmem_limit_bytes=vmem_limit),
    )(xin, wbig, w2f, wfc1, wfc2, sb, msk, pool)

    # un-fold the batch-in-lanes layout back to (B, Co, Lout)
    return (out_blk.reshape(nblk, Co, Bt, Lout)
                   .transpose(0, 2, 1, 3)
                   .reshape(B, Co, Lout))


def make_params(key, in_channels, out_channels, stride, reduction=16):
    """Deterministic synthetic params in PyTorch layouts. BN folded to (scale, bias)
    in eval mode with running_mean=0, running_var=1 (fresh-module defaults)."""
    eps = 1e-5
    Cr = max(1, out_channels // reduction)
    ks = jax.random.split(key, 11)

    def bn_fold(kg, kb, c):
        gamma = 1.0 + 0.1 * jax.random.normal(kg, (c, 1), jnp.float32)
        beta = 0.1 * jax.random.normal(kb, (c, 1), jnp.float32)
        return gamma / jnp.sqrt(1.0 + eps), beta

    p = {}
    p["w1"] = 0.2 * jax.random.normal(ks[0], (out_channels, in_channels, 3), jnp.float32)
    p["s1"], p["b1"] = bn_fold(ks[1], ks[2], out_channels)
    p["w2"] = 0.2 * jax.random.normal(ks[3], (out_channels, out_channels, 3), jnp.float32)
    p["s2"], p["b2"] = bn_fold(ks[4], ks[5], out_channels)
    p["wfc1"] = 0.3 * jax.random.normal(ks[6], (Cr, out_channels), jnp.float32)
    p["wfc2"] = 0.3 * jax.random.normal(ks[7], (out_channels, Cr), jnp.float32)
    if stride != 1 or in_channels != out_channels:
        p["wsc"] = 0.2 * jax.random.normal(ks[8], (out_channels, in_channels), jnp.float32)
        p["ssc"], p["bsc"] = bn_fold(ks[9], ks[10], out_channels)
    return p


def _bf16(v):
    """Round through bf16 (mirrors the kernel's MXU-operand casts)."""
    return v.astype(jnp.bfloat16).astype(jnp.float32)


def reference_forward(x, params, stride):
    """Pure-JAX reference with the same bf16 operand rounding as the kernel."""
    B, Ci, L = x.shape
    w1 = params["w1"]
    Co = w1.shape[0]
    Lout = (L - 1) // stride + 1
    has_proj = (stride != 1) or (Ci != Co)

    xp = jnp.pad(x, ((0, 0), (0, 0), (1, 1)))
    taps = [xp[:, :, k:k + (Lout - 1) * stride + 1:stride] for k in range(3)]

    w1b, w2b = _bf16(w1), _bf16(params["w2"])
    acc1 = jnp.zeros((B, Co, Lout), jnp.float32)
    for k, t in enumerate(taps):
        acc1 = acc1 + jnp.einsum("oi,bin->bon", w1b[:, :, k], _bf16(t))
    out1 = jnp.maximum(acc1 * params["s1"] + params["b1"], 0.0)

    o1p = jnp.pad(_bf16(out1), ((0, 0), (0, 0), (1, 1)))
    acc2 = jnp.zeros((B, Co, Lout), jnp.float32)
    for k in range(3):
        acc2 = acc2 + jnp.einsum("oi,bin->bon", w2b[:, :, k], o1p[:, :, k:k + Lout])
    out2 = acc2 * params["s2"] + params["b2"]

    y = jnp.mean(_bf16(out2), axis=2)                                # (B, Co)
    h = jnp.maximum(jnp.einsum("ro,bo->br", _bf16(params["wfc1"]), _bf16(y)), 0.0)
    z = jax.nn.sigmoid(jnp.einsum("or,br->bo", _bf16(params["wfc2"]), _bf16(h)))
    out2 = out2 * z[:, :, None]

    if has_proj:
        xs = xp[:, :, 1:1 + (Lout - 1) * stride + 1:stride]
        sc = (jnp.einsum("oi,bin->bon", _bf16(params["wsc"]), _bf16(xs))
              * params["ssc"] + params["bsc"])
    else:
        sc = _bf16(x)                                                # bf16-rounded identity
    return jnp.maximum(out2 + sc, 0.0)


if __name__ == "__main__":
    key = jax.random.PRNGKey(0)
    configs = [
        # (B, Ci, Co, L, stride, batch_block)
        (2, 16, 32, 16, 1, 1),     # projection shortcut; taps built in-kernel; grid of 2
        (4, 32, 32, 16, 1, 2),     # identity shortcut; 2 batch elements folded per step
        (2, 16, 32, 16, 2, 1),     # strided projection shortcut; bf16 im2col path
        (4, 16, 32, 16, 1, None),  # default batch_block heuristic
    ]
    for idx, (B, Ci, Co, L, stride, bt) in enumerate(configs):
        kx, kp, key = jax.random.split(key, 3)
        x = jax.random.normal(kx, (B, Ci, L), jnp.float32)
        params = make_params(kp, Ci, Co, stride)

        out = jax.block_until_ready(
            resnet_block_forward(x, params, stride, batch_block=bt))
        ref = reference_forward(x, params, stride)

        Lout = (L - 1) // stride + 1
        assert out.shape == (B, Co, Lout), f"bad shape in config {idx}"
        assert jnp.allclose(out, ref, rtol=2e-2, atol=2e-2), f"mismatch in config {idx}"

    print("KERNEL_OK")
</pallas_src>

<mosaic_0001>
module attributes {stable_mosaic.version = 11 : i64} {
  func.func @_resnet_block_kernel(%arg0: i32, %arg1: memref<1x16x16xbf16, #tpu.memory_space<vmem>>, %arg2: memref<64x48xbf16, #tpu.memory_space<vmem>>, %arg3: memref<32x96xbf16, #tpu.memory_space<vmem>>, %arg4: memref<2x32xbf16, #tpu.memory_space<vmem>>, %arg5: memref<32x2xbf16, #tpu.memory_space<vmem>>, %arg6: memref<32x8xf32, #tpu.memory_space<vmem>>, %arg7: memref<2x16xbf16, #tpu.memory_space<vmem>>, %arg8: memref<16x1xbf16, #tpu.memory_space<vmem>>, %arg9: memref<1x32x16xf32, #tpu.memory_space<vmem>>) attributes {dimension_semantics = [#tpu.dimension_semantics<parallel>], iteration_bounds = array<i64: 2>, scalar_prefetch = 0 : i64, scratch_operands = 0 : i64, tpu.core_type = #tpu.core_type<tc>, window_params = [{transform_indices = @transform_0, window_bounds = array<i64: 1, 16, 16>}, {pipeline_mode = #tpu.pipeline_mode<synchronous>, transform_indices = @transform_1, window_bounds = array<i64: 64, 48>}, {pipeline_mode = #tpu.pipeline_mode<synchronous>, transform_indices = @transform_2, window_bounds = array<i64: 32, 96>}, {pipeline_mode = #tpu.pipeline_mode<synchronous>, transform_indices = @transform_3, window_bounds = array<i64: 2, 32>}, {pipeline_mode = #tpu.pipeline_mode<synchronous>, transform_indices = @transform_4, window_bounds = array<i64: 32, 2>}, {pipeline_mode = #tpu.pipeline_mode<synchronous>, transform_indices = @transform_5, window_bounds = array<i64: 32, 8>}, {pipeline_mode = #tpu.pipeline_mode<synchronous>, transform_indices = @transform_6, window_bounds = array<i64: 2, 16>}, {pipeline_mode = #tpu.pipeline_mode<synchronous>, transform_indices = @transform_7, window_bounds = array<i64: 16, 1>}, {transform_indices = @transform_8, window_bounds = array<i64: 1, 32, 16>}]} {
    %c0 = arith.constant 0 : index
    %c0_0 = arith.constant 0 : index
    %0 = vector.load %arg7[%c0, %c0_0] : memref<2x16xbf16, #tpu.memory_space<vmem>>, vector<1x16xbf16>
    %c1 = arith.constant 1 : index
    %c0_1 = arith.constant 0 : index
    %1 = vector.load %arg7[%c1, %c0_1] : memref<2x16xbf16, #tpu.memory_space<vmem>>, vector<1x16xbf16>
    %c0_2 = arith.constant 0 : index
    %c0_3 = arith.constant 0 : index
    %2 = vector.load %arg6[%c0_2, %c0_3] : memref<32x8xf32, #tpu.memory_space<vmem>>, vector<32x1xf32>
    %c0_4 = arith.constant 0 : index
    %c1_5 = arith.constant 1 : index
    %3 = vector.load %arg6[%c0_4, %c1_5] : memref<32x8xf32, #tpu.memory_space<vmem>>, vector<32x1xf32>
    %c0_6 = arith.constant 0 : index
    %c2 = arith.constant 2 : index
    %4 = vector.load %arg6[%c0_6, %c2] : memref<32x8xf32, #tpu.memory_space<vmem>>, vector<32x1xf32>
    %c0_7 = arith.constant 0 : index
    %c3 = arith.constant 3 : index
    %5 = vector.load %arg6[%c0_7, %c3] : memref<32x8xf32, #tpu.memory_space<vmem>>, vector<32x1xf32>
    %c0_8 = arith.constant 0 : index
    %c0_9 = arith.constant 0 : index
    %c0_10 = arith.constant 0 : index
    %6 = vector.load %arg1[%c0_8, %c0_9, %c0_10] : memref<1x16x16xbf16, #tpu.memory_space<vmem>>, vector<1x16x16xbf16>
    %7 = vector.shape_cast %6 : vector<1x16x16xbf16> to vector<16x16xbf16>
    %c0_i32 = arith.constant 0 : i32
    %8 = arith.sitofp %c0_i32 : i32 to bf16
    %9 = vector.broadcast %8 : bf16 to vector<16x1xbf16>
    %10 = tpu.concatenate %9, %7 in 1 : vector<16x1xbf16>, vector<16x16xbf16> -> vector<16x17xbf16>
    %11 = vector.broadcast %8 : bf16 to vector<16x1xbf16>
    %12 = tpu.concatenate %10, %11 in 1 : vector<16x17xbf16>, vector<16x1xbf16> -> vector<16x18xbf16>
    %13 = vector.extract_strided_slice %12 {offsets = [0, 0], sizes = [16, 16], strides = [1, 1]} : vector<16x18xbf16> to vector<16x16xbf16>
    %14 = vector.broadcast %0 : vector<1x16xbf16> to vector<16x16xbf16>
    %15 = arith.mulf %13, %14 : vector<16x16xbf16>
    %16 = vector.extract_strided_slice %12 {offsets = [0, 2], sizes = [16, 16], strides = [1, 1]} : vector<16x18xbf16> to vector<16x16xbf16>
    %17 = vector.broadcast %1 : vector<1x16xbf16> to vector<16x16xbf16>
    %18 = arith.mulf %16, %17 : vector<16x16xbf16>
    %19 = tpu.concatenate %15, %7, %18 in 0 : vector<16x16xbf16>, vector<16x16xbf16>, vector<16x16xbf16> -> vector<48x16xbf16>
    %c0_11 = arith.constant 0 : index
    %c0_12 = arith.constant 0 : index
    %20 = vector.load %arg2[%c0_11, %c0_12] : memref<64x48xbf16, #tpu.memory_space<vmem>>, vector<64x48xbf16>
    %cst = arith.constant dense<0.000000e+00> : vector<64x16xf32>
    %21 = tpu.matmul %20, %19, %cst {dimension_numbers = #tpu.dot_dimension_numbers<[1], [0], [0], [1], [0, 0, 1, 1], [], []>} : vector<64x48xbf16>, vector<48x16xbf16>, vector<64x16xf32> -> vector<64x16xf32>
    %c0_13 = arith.constant 0 : index
    %c4 = arith.constant 4 : index
    %22 = vector.load %arg6[%c0_13, %c4] : memref<32x8xf32, #tpu.memory_space<vmem>>, vector<32x1xf32>
    %c0_14 = arith.constant 0 : index
    %c5 = arith.constant 5 : index
    %23 = vector.load %arg6[%c0_14, %c5] : memref<32x8xf32, #tpu.memory_space<vmem>>, vector<32x1xf32>
    %24 = vector.extract_strided_slice %21 {offsets = [32, 0], sizes = [32, 16], strides = [1, 1]} : vector<64x16xf32> to vector<32x16xf32>
    %25 = vector.broadcast %22 : vector<32x1xf32> to vector<32x16xf32>
    %26 = arith.mulf %24, %25 : vector<32x16xf32>
    %27 = vector.broadcast %23 : vector<32x1xf32> to vector<32x16xf32>
    %28 = arith.addf %26, %27 : vector<32x16xf32>
    %29 = vector.extract_strided_slice %21 {offsets = [0, 0], sizes = [32, 16], strides = [1, 1]} : vector<64x16xf32> to vector<32x16xf32>
    %30 = vector.broadcast %2 : vector<32x1xf32> to vector<32x16xf32>
    %31 = arith.mulf %29, %30 : vector<32x16xf32>
    %32 = vector.broadcast %3 : vector<32x1xf32> to vector<32x16xf32>
    %33 = arith.addf %31, %32 : vector<32x16xf32>
    %cst_15 = arith.constant 0.000000e+00 : f32
    %34 = vector.broadcast %cst_15 : f32 to vector<32x16xf32>
    %35 = arith.maximumf %33, %34 : vector<32x16xf32>
    %36 = arith.truncf %35 : vector<32x16xf32> to vector<32x16xbf16>
    %c0_i32_16 = arith.constant 0 : i32
    %37 = arith.sitofp %c0_i32_16 : i32 to bf16
    %38 = vector.broadcast %37 : bf16 to vector<32x1xbf16>
    %39 = tpu.concatenate %38, %36 in 1 : vector<32x1xbf16>, vector<32x16xbf16> -> vector<32x17xbf16>
    %40 = vector.broadcast %37 : bf16 to vector<32x1xbf16>
    %41 = tpu.concatenate %39, %40 in 1 : vector<32x17xbf16>, vector<32x1xbf16> -> vector<32x18xbf16>
    %42 = vector.extract_strided_slice %41 {offsets = [0, 0], sizes = [32, 16], strides = [1, 1]} : vector<32x18xbf16> to vector<32x16xbf16>
    %43 = vector.broadcast %0 : vector<1x16xbf16> to vector<32x16xbf16>
    %44 = arith.mulf %42, %43 : vector<32x16xbf16>
    %45 = vector.extract_strided_slice %41 {offsets = [0, 2], sizes = [32, 16], strides = [1, 1]} : vector<32x18xbf16> to vector<32x16xbf16>
    %46 = vector.broadcast %1 : vector<1x16xbf16> to vector<32x16xbf16>
    %47 = arith.mulf %45, %46 : vector<32x16xbf16>
    %48 = tpu.concatenate %44, %36, %47 in 0 : vector<32x16xbf16>, vector<32x16xbf16>, vector<32x16xbf16> -> vector<96x16xbf16>
    %c0_17 = arith.constant 0 : index
    %c0_18 = arith.constant 0 : index
    %49 = vector.load %arg3[%c0_17, %c0_18] : memref<32x96xbf16, #tpu.memory_space<vmem>>, vector<32x96xbf16>
    %cst_19 = arith.constant dense<0.000000e+00> : vector<32x16xf32>
    %50 = tpu.matmul %49, %48, %cst_19 {dimension_numbers = #tpu.dot_dimension_numbers<[1], [0], [0], [1], [0, 0, 1, 1], [], []>} : vector<32x96xbf16>, vector<96x16xbf16>, vector<32x16xf32> -> vector<32x16xf32>
    %51 = vector.broadcast %4 : vector<32x1xf32> to vector<32x16xf32>
    %52 = arith.mulf %50, %51 : vector<32x16xf32>
    %53 = vector.broadcast %5 : vector<32x1xf32> to vector<32x16xf32>
    %54 = arith.addf %52, %53 : vector<32x16xf32>
    %55 = arith.truncf %54 : vector<32x16xf32> to vector<32x16xbf16>
    %c0_20 = arith.constant 0 : index
    %c0_21 = arith.constant 0 : index
    %56 = vector.load %arg8[%c0_20, %c0_21] : memref<16x1xbf16, #tpu.memory_space<vmem>>, vector<16x1xbf16>
    %cst_22 = arith.constant dense<0.000000e+00> : vector<32x1xf32>
    %57 = tpu.matmul %55, %56, %cst_22 {dimension_numbers = #tpu.dot_dimension_numbers<[1], [0], [0], [1], [0, 0, 1, 1], [], []>} : vector<32x16xbf16>, vector<16x1xbf16>, vector<32x1xf32> -> vector<32x1xf32>
    %c0_23 = arith.constant 0 : index
    %c0_24 = arith.constant 0 : index
    %58 = vector.load %arg4[%c0_23, %c0_24] : memref<2x32xbf16, #tpu.memory_space<vmem>>, vector<2x32xbf16>
    %59 = arith.truncf %57 : vector<32x1xf32> to vector<32x1xbf16>
    %cst_25 = arith.constant dense<0.000000e+00> : vector<2x1xf32>
    %60 = tpu.matmul %58, %59, %cst_25 {dimension_numbers = #tpu.dot_dimension_numbers<[1], [0], [0], [1], [0, 0, 1, 1], [], []>} : vector<2x32xbf16>, vector<32x1xbf16>, vector<2x1xf32> -> vector<2x1xf32>
    %cst_26 = arith.constant 0.000000e+00 : f32
    %61 = vector.broadcast %cst_26 : f32 to vector<2x1xf32>
    %62 = arith.maximumf %60, %61 : vector<2x1xf32>
    %c0_27 = arith.constant 0 : index
    %c0_28 = arith.constant 0 : index
    %63 = vector.load %arg5[%c0_27, %c0_28] : memref<32x2xbf16, #tpu.memory_space<vmem>>, vector<32x2xbf16>
    %64 = arith.truncf %62 : vector<2x1xf32> to vector<2x1xbf16>
    %cst_29 = arith.constant dense<0.000000e+00> : vector<32x1xf32>
    %65 = tpu.matmul %63, %64, %cst_29 {dimension_numbers = #tpu.dot_dimension_numbers<[1], [0], [0], [1], [0, 0, 1, 1], [], []>} : vector<32x2xbf16>, vector<2x1xbf16>, vector<32x1xf32> -> vector<32x1xf32>
    %66 = arith.negf %65 : vector<32x1xf32>
    %67 = math.exp %66 : vector<32x1xf32>
    %cst_30 = arith.constant 1.000000e+00 : f32
    %68 = vector.broadcast %cst_30 : f32 to vector<32x1xf32>
    %69 = arith.addf %68, %67 : vector<32x1xf32>
    %70 = arith.divf %68, %69 : vector<32x1xf32>
    %71 = vector.broadcast %70 : vector<32x1xf32> to vector<32x16xf32>
    %72 = arith.mulf %54, %71 : vector<32x16xf32>
    %73 = arith.addf %72, %28 : vector<32x16xf32>
    %cst_31 = arith.constant 0.000000e+00 : f32
    %74 = vector.broadcast %cst_31 : f32 to vector<32x16xf32>
    %75 = arith.maximumf %73, %74 : vector<32x16xf32>
    %c0_32 = arith.constant 0 : index
    %c0_33 = arith.constant 0 : index
    %c0_34 = arith.constant 0 : index
    %76 = vector.load %arg9[%c0_32, %c0_33, %c0_34] : memref<1x32x16xf32, #tpu.memory_space<vmem>>, vector<1x32x16xf32>
    %77 = vector.shape_cast %76 : vector<1x32x16xf32> to vector<32x16xf32>
    %78 = vector.shape_cast %75 : vector<32x16xf32> to vector<1x32x16xf32>
    tpu.vector_store %arg9[%c0_32, %c0_33, %c0_34], %78 {strides = array<i32>} : memref<1x32x16xf32, #tpu.memory_space<vmem>>, vector<1x32x16xf32>,
    return
  }
  func.func @transform_0(%arg0: i32) -> (i32, i32, i32) {
    %c0_i32 = arith.constant 0 : i32
    %c0_i32_0 = arith.constant 0 : i32
    %c0_i32_1 = arith.constant 0 : i32
    return %arg0, %c0_i32, %c0_i32_0 : i32, i32, i32
  }
  func.func @transform_1(%arg0: i32) -> (i32, i32) {
    %c0_i32 = arith.constant 0 : i32
    %c0_i32_0 = arith.constant 0 : i32
    %c0_i32_1 = arith.constant 0 : i32
    return %c0_i32, %c0_i32_0 : i32, i32
  }
  func.func @transform_2(%arg0: i32) -> (i32, i32) {
    %c0_i32 = arith.constant 0 : i32
    %c0_i32_0 = arith.constant 0 : i32
    %c0_i32_1 = arith.constant 0 : i32
    return %c0_i32, %c0_i32_0 : i32, i32
  }
  func.func @transform_3(%arg0: i32) -> (i32, i32) {
    %c0_i32 = arith.constant 0 : i32
    %c0_i32_0 = arith.constant 0 : i32
    %c0_i32_1 = arith.constant 0 : i32
    return %c0_i32, %c0_i32_0 : i32, i32
  }
  func.func @transform_4(%arg0: i32) -> (i32, i32) {
    %c0_i32 = arith.constant 0 : i32
    %c0_i32_0 = arith.constant 0 : i32
    %c0_i32_1 = arith.constant 0 : i32
    return %c0_i32, %c0_i32_0 : i32, i32
  }
  func.func @transform_5(%arg0: i32) -> (i32, i32) {
    %c0_i32 = arith.constant 0 : i32
    %c0_i32_0 = arith.constant 0 : i32
    %c0_i32_1 = arith.constant 0 : i32
    return %c0_i32, %c0_i32_0 : i32, i32
  }
  func.func @transform_6(%arg0: i32) -> (i32, i32) {
    %c0_i32 = arith.constant 0 : i32
    %c0_i32_0 = arith.constant 0 : i32
    %c0_i32_1 = arith.constant 0 : i32
    return %c0_i32, %c0_i32_0 : i32, i32
  }
  func.func @transform_7(%arg0: i32) -> (i32, i32) {
    %c0_i32 = arith.constant 0 : i32
    %c0_i32_0 = arith.constant 0 : i32
    %c0_i32_1 = arith.constant 0 : i32
    return %c0_i32, %c0_i32_0 : i32, i32
  }
  func.func @transform_8(%arg0: i32) -> (i32, i32, i32) {
    %c0_i32 = arith.constant 0 : i32
    %c0_i32_0 = arith.constant 0 : i32
    %c0_i32_1 = arith.constant 0 : i32
    return %arg0, %c0_i32, %c0_i32_0 : i32, i32, i32
  }
}

</mosaic_0001>

<llo_original>
// kernel: tpu_custom_call.1
$region0: #{tpu_custom_call.1}
  #allocation0 [shape = 'u32[]', space=smem, size = 0x4, offset = 0x4, fixed_abs, tag = 'smem constant byte address 0x4 - core index']
  #allocation1 [shape = 'u32[144,128]{1,0:T(1,128)}', space=vmem, size = 0x12000, scoped, tag = 'internal scratch']
  %s0 = inlined_call_operand.vmem [shape: bf16[2,16,16], index: 0, kind: input, shape index: {}]
  %s1 = inlined_call_operand.vmem [shape: bf16[64,48], index: 1, kind: input, shape index: {}]
  %s2 = inlined_call_operand.vmem [shape: bf16[32,96], index: 2, kind: input, shape index: {}]
  %s3 = inlined_call_operand.vmem [shape: bf16[2,32], index: 3, kind: input, shape index: {}]
  %s4 = inlined_call_operand.vmem [shape: bf16[32,2], index: 4, kind: input, shape index: {}]
  %s5 = inlined_call_operand.vmem [shape: f32[32,8], index: 5, kind: input, shape index: {}]
  %s6 = inlined_call_operand.vmem [shape: bf16[2,16], index: 6, kind: input, shape index: {}]
  %s7 = inlined_call_operand.vmem [shape: bf16[16,1], index: 7, kind: input, shape index: {}]
  %s8 = inlined_call_operand.vmem [shape: f32[2,32,16], index: 8, kind: output, shape index: {}]
  %s9 = sld [smem:[#allocation0]]
  $region65: #{tpu_custom_call.1} parent=0
    _
  %s11 = ssub.s32 1, %s9
  %s12 = scalar_select 0, %s11, %s9
  loop: start=0, step=1, limit=4
  $region2: #{tpu_custom_call.1} parent=0 // loop_pre_header
    _
  $region3: #{tpu_custom_call.1} parent=0 // loop_header
    %s14 = sphi 0, %s18
    %p15 = scmp.ge.s32.totalorder %s14, 4
    %s24 = sphi 0, %s26
    %s27 = sphi 0, %s24
    %s28 = sphi 0, %s27
    %s44 = sphi 0, %s28
    %s48 = sphi 0, %s48
    %s50 = sphi 0, %s48
    %s51 = sphi 0, %s50
    %s65 = sphi 0, %s51
    %s69 = sphi 0, %s69
    %s71 = sphi 0, %s69
    %s72 = sphi 0, %s71
    %s86 = sphi 0, %s72
    %s90 = sphi 0, %s90
    %s92 = sphi 0, %s90
    %s93 = sphi 0, %s92
    %s107 = sphi 0, %s93
    %s111 = sphi 0, %s111
    %s113 = sphi 0, %s111
    %s114 = sphi 0, %s113
    %s128 = sphi 0, %s114
    %s132 = sphi 0, %s132
    %s134 = sphi 0, %s132
    %s135 = sphi 0, %s134
    %s149 = sphi 0, %s135
    %s153 = sphi 0, %s153
    %s155 = sphi 0, %s153
    %s156 = sphi 0, %s155
    %s170 = sphi 0, %s156
    %s174 = sphi 0, %s174
    %s176 = sphi 0, %s174
    %s177 = sphi 0, %s176
    %s191 = sphi 0, %s177
    %s197 = sphi 0, %s199
    %s200 = sphi 0, %s197
    %s201 = sphi 0, %s200
    %s217 = sphi 0, %s201
  $region4: #{tpu_custom_call.1} parent=0 // loop_header_branch
    %17 = sbr.rel (%p15) target = $region8
  $region5: #{tpu_custom_call.1} parent=0 // loop_body
    %s19 = ssub.s32 %s14, 1
    %s20 = ssub.s32 %s14, 2
    %s21 = sadd.s32 %s14, 1
    %s22 = ssub.s32 %s14, %s21
    %p23 = scmp.eq.s32.totalorder %s22, 0
    %s25 = sadd.s32 %s24, 1
    %s26 = scalar_select %p23, %s24, %s25
    %p29 = pneg %p23
    %p30 = scmp.eq.s32.totalorder %s14, 1
    %p31 = por %p29, %p30
    %p32 = scmp.ne.s32.totalorder %s24, %s27
    %p33 = scmp.eq.s32.totalorder %s14, 0
    %p34 = por %p32, %p33
    %p35 = scmp.ne.s32.totalorder %s24, %s27
    %p36 = scmp.eq.s32.totalorder %s19, 1
    %p37 = por %p35, %p36
    %p38 = scmp.ne.s32.totalorder %s27, %s28
    %p39 = scmp.eq.s32.totalorder %s19, 0
    %p40 = por %p38, %p39
    %p41 = scmp.ne.s32.totalorder %s27, %s28
    %p42 = scmp.eq.s32.totalorder %s20, 1
    %p43 = por %p41, %p42
    %p45 = scmp.ne.s32.totalorder %s28, %s44
    %p46 = scmp.eq.s32.totalorder %s20, 0
    %p47 = por %p45, %p46
    %s49 = sadd.s32 %s48, 1
    %p52 = scmp.eq.s32.totalorder %s14, 1
    %p53 = scmp.ne.s32.totalorder %s48, %s50
    %p54 = scmp.eq.s32.totalorder %s14, 0
    %p55 = por %p53, %p54
    %p56 = scmp.ne.s32.totalorder %s48, %s50
    %p57 = scmp.eq.s32.totalorder %s19, 1
    %p58 = por %p56, %p57
    %p59 = scmp.ne.s32.totalorder %s50, %s51
    %p60 = scmp.eq.s32.totalorder %s19, 0
    %p61 = por %p59, %p60
    %p62 = scmp.ne.s32.totalorder %s50, %s51
    %p63 = scmp.eq.s32.totalorder %s20, 1
    %p64 = por %p62, %p63
    %p66 = scmp.ne.s32.totalorder %s51, %s65
    %p67 = scmp.eq.s32.totalorder %s20, 0
    %p68 = por %p66, %p67
    %s70 = sadd.s32 %s69, 1
    %p73 = scmp.eq.s32.totalorder %s14, 1
    %p74 = scmp.ne.s32.totalorder %s69, %s71
    %p75 = scmp.eq.s32.totalorder %s14, 0
    %p76 = por %p74, %p75
    %p77 = scmp.ne.s32.totalorder %s69, %s71
    %p78 = scmp.eq.s32.totalorder %s19, 1
    %p79 = por %p77, %p78
    %p80 = scmp.ne.s32.totalorder %s71, %s72
    %p81 = scmp.eq.s32.totalorder %s19, 0
    %p82 = por %p80, %p81
    %p83 = scmp.ne.s32.totalorder %s71, %s72
    %p84 = scmp.eq.s32.totalorder %s20, 1
    %p85 = por %p83, %p84
    %p87 = scmp.ne.s32.totalorder %s72, %s86
    %p88 = scmp.eq.s32.totalorder %s20, 0
    %p89 = por %p87, %p88
    %s91 = sadd.s32 %s90, 1
    %p94 = scmp.eq.s32.totalorder %s14, 1
    %p95 = scmp.ne.s32.totalorder %s90, %s92
    %p96 = scmp.eq.s32.totalorder %s14, 0
    %p97 = por %p95, %p96
    %p98 = scmp.ne.s32.totalorder %s90, %s92
    %p99 = scmp.eq.s32.totalorder %s19, 1
    %p100 = por %p98, %p99
    %p101 = scmp.ne.s32.totalorder %s92, %s93
    %p102 = scmp.eq.s32.totalorder %s19, 0
    %p103 = por %p101, %p102
    %p104 = scmp.ne.s32.totalorder %s92, %s93
    %p105 = scmp.eq.s32.totalorder %s20, 1
    %p106 = por %p104, %p105
    %p108 = scmp.ne.s32.totalorder %s93, %s107
    %p109 = scmp.eq.s32.totalorder %s20, 0
    %p110 = por %p108, %p109
    %s112 = sadd.s32 %s111, 1
    %p115 = scmp.eq.s32.totalorder %s14, 1
    %p116 = scmp.ne.s32.totalorder %s111, %s113
    %p117 = scmp.eq.s32.totalorder %s14, 0
    %p118 = por %p116, %p117
    %p119 = scmp.ne.s32.totalorder %s111, %s113
    %p120 = scmp.eq.s32.totalorder %s19, 1
    %p121 = por %p119, %p120
    %p122 = scmp.ne.s32.totalorder %s113, %s114
    %p123 = scmp.eq.s32.totalorder %s19, 0
    %p124 = por %p122, %p123
    %p125 = scmp.ne.s32.totalorder %s113, %s114
    %p126 = scmp.eq.s32.totalorder %s20, 1
    %p127 = por %p125, %p126
    %p129 = scmp.ne.s32.totalorder %s114, %s128
    %p130 = scmp.eq.s32.totalorder %s20, 0
    %p131 = por %p129, %p130
    %s133 = sadd.s32 %s132, 1
    %p136 = scmp.eq.s32.totalorder %s14, 1
    %p137 = scmp.ne.s32.totalorder %s132, %s134
    %p138 = scmp.eq.s32.totalorder %s14, 0
    %p139 = por %p137, %p138
    %p140 = scmp.ne.s32.totalorder %s132, %s134
    %p141 = scmp.eq.s32.totalorder %s19, 1
    %p142 = por %p140, %p141
    %p143 = scmp.ne.s32.totalorder %s134, %s135
    %p144 = scmp.eq.s32.totalorder %s19, 0
    %p145 = por %p143, %p144
    %p146 = scmp.ne.s32.totalorder %s134, %s135
    %p147 = scmp.eq.s32.totalorder %s20, 1
    %p148 = por %p146, %p147
    %p150 = scmp.ne.s32.totalorder %s135, %s149
    %p151 = scmp.eq.s32.totalorder %s20, 0
    %p152 = por %p150, %p151
    %s154 = sadd.s32 %s153, 1
    %p157 = scmp.eq.s32.totalorder %s14, 1
    %p158 = scmp.ne.s32.totalorder %s153, %s155
    %p159 = scmp.eq.s32.totalorder %s14, 0
    %p160 = por %p158, %p159
    %p161 = scmp.ne.s32.totalorder %s153, %s155
    %p162 = scmp.eq.s32.totalorder %s19, 1
    %p163 = por %p161, %p162
    %p164 = scmp.ne.s32.totalorder %s155, %s156
    %p165 = scmp.eq.s32.totalorder %s19, 0
    %p166 = por %p164, %p165
    %p167 = scmp.ne.s32.totalorder %s155, %s156
    %p168 = scmp.eq.s32.totalorder %s20, 1
    %p169 = por %p167, %p168
    %p171 = scmp.ne.s32.totalorder %s156, %s170
    %p172 = scmp.eq.s32.totalorder %s20, 0
    %p173 = por %p171, %p172
    %s175 = sadd.s32 %s174, 1
    %p178 = scmp.eq.s32.totalorder %s14, 1
    %p179 = scmp.ne.s32.totalorder %s174, %s176
    %p180 = scmp.eq.s32.totalorder %s14, 0
    %p181 = por %p179, %p180
    %p182 = scmp.ne.s32.totalorder %s174, %s176
    %p183 = scmp.eq.s32.totalorder %s19, 1
    %p184 = por %p182, %p183
    %p185 = scmp.ne.s32.totalorder %s176, %s177
    %p186 = scmp.eq.s32.totalorder %s19, 0
    %p187 = por %p185, %p186
    %p188 = scmp.ne.s32.totalorder %s176, %s177
    %p189 = scmp.eq.s32.totalorder %s20, 1
    %p190 = por %p188, %p189
    %p192 = scmp.ne.s32.totalorder %s177, %s191
    %p193 = scmp.eq.s32.totalorder %s20, 0
    %p194 = por %p192, %p193
    %s195 = ssub.s32 %s14, %s21
    %p196 = scmp.eq.s32.totalorder %s195, 0
    %s198 = sadd.s32 %s197, 1
    %s199 = scalar_select %p196, %s197, %s198
    %p202 = pneg %p196
    %p203 = scmp.eq.s32.totalorder %s14, 1
    %p204 = por %p202, %p203
    %p205 = scmp.ne.s32.totalorder %s197, %s200
    %p206 = scmp.eq.s32.totalorder %s14, 0
    %p207 = por %p205, %p206
    %p208 = scmp.ne.s32.totalorder %s197, %s200
    %p209 = scmp.eq.s32.totalorder %s19, 1
    %p210 = por %p208, %p209
    %p211 = scmp.ne.s32.totalorder %s200, %s201
    %p212 = scmp.eq.s32.totalorder %s19, 0
    %p213 = por %p211, %p212
    %p214 = scmp.ne.s32.totalorder %s200, %s201
    %p215 = scmp.eq.s32.totalorder %s20, 1
    %p216 = por %p214, %p215
    %p218 = scmp.ne.s32.totalorder %s201, %s217
    %p219 = scmp.eq.s32.totalorder %s20, 0
    %p220 = por %p218, %p219
    %p221 = scmp.le.s32.totalorder 1, %s14
    %p222 = scmp.lt.s32.totalorder %s14, 3
    %p223 = pnand %p221, %p222
    %p224 = pneg %p223
    // Predicated region
    $region9: #{tpu_custom_call.1} parent=5 // pred_check
      _
    $region10: #{tpu_custom_call.1} parent=5 // pred_check_branch
      %226 = sbr.rel (%p223) target = $region12
    $region11: #{tpu_custom_call.1} parent=5 // pred_region
      %s227 = ssub.s32 %s14, 1
      // Predicated region
      $region13: #{tpu_custom_call.1} parent=11 // pred_check
        %p228 = pneg %p61
      $region14: #{tpu_custom_call.1} parent=11 // pred_check_branch
        %230 = sbr.rel (%p228) target = $region16
      $region15: #{tpu_custom_call.1} parent=11 // pred_region
        _
      $region16: #{tpu_custom_call.1} parent=11 // pred_fallthru
        _
      // Predicated region
      $region17: #{tpu_custom_call.1} parent=11 // pred_check
        %p231 = pneg %p82
      $region18: #{tpu_custom_call.1} parent=11 // pred_check_branch
        %233 = sbr.rel (%p231) target = $region20
      $region19: #{tpu_custom_call.1} parent=11 // pred_region
        _
      $region20: #{tpu_custom_call.1} parent=11 // pred_fallthru
        _
      // Predicated region
      $region21: #{tpu_custom_call.1} parent=11 // pred_check
        %p234 = pneg %p103
      $region22: #{tpu_custom_call.1} parent=11 // pred_check_branch
        %236 = sbr.rel (%p234) target = $region24
      $region23: #{tpu_custom_call.1} parent=11 // pred_region
        _
      $region24: #{tpu_custom_call.1} parent=11 // pred_fallthru
        _
      // Predicated region
      $region25: #{tpu_custom_call.1} parent=11 // pred_check
        %p237 = pneg %p124
      $region26: #{tpu_custom_call.1} parent=11 // pred_check_branch
        %239 = sbr.rel (%p237) target = $region28
      $region27: #{tpu_custom_call.1} parent=11 // pred_region
        _
      $region28: #{tpu_custom_call.1} parent=11 // pred_fallthru
        _
      // Predicated region
      $region29: #{tpu_custom_call.1} parent=11 // pred_check
        %p240 = pneg %p145
      $region30: #{tpu_custom_call.1} parent=11 // pred_check_branch
        %242 = sbr.rel (%p240) target = $region32
      $region31: #{tpu_custom_call.1} parent=11 // pred_region
        _
      $region32: #{tpu_custom_call.1} parent=11 // pred_fallthru
        _
      // Predicated region
      $region33: #{tpu_custom_call.1} parent=11 // pred_check
        %p243 = pneg %p166
      $region34: #{tpu_custom_call.1} parent=11 // pred_check_branch
        %245 = sbr.rel (%p243) target = $region36
      $region35: #{tpu_custom_call.1} parent=11 // pred_region
        _
      $region36: #{tpu_custom_call.1} parent=11 // pred_fallthru
        _
      // Predicated region
      $region37: #{tpu_custom_call.1} parent=11 // pred_check
        %p246 = pneg %p187
      $region38: #{tpu_custom_call.1} parent=11 // pred_check_branch
        %248 = sbr.rel (%p246) target = $region40
      $region39: #{tpu_custom_call.1} parent=11 // pred_region
        _
      $region40: #{tpu_custom_call.1} parent=11 // pred_fallthru
        _
    $region12: #{tpu_custom_call.1} parent=5 // pred_fallthru
      _
    %p249 = scmp.lt.s32.totalorder %s14, 2
    // Predicated region
    $region41: #{tpu_custom_call.1} parent=5 // pred_check
      %p250 = pneg %p249
    $region42: #{tpu_custom_call.1} parent=5 // pred_check_branch
      %252 = sbr.rel (%p250) target = $region44
    $region43: #{tpu_custom_call.1} parent=5 // pred_region
      // Predicated region
      $region45: #{tpu_custom_call.1} parent=43 // pred_check
        %p253 = pneg %p34
      $region46: #{tpu_custom_call.1} parent=43 // pred_check_branch
        %255 = sbr.rel (%p253) target = $region48
      $region47: #{tpu_custom_call.1} parent=43 // pred_region
        %p256 = scmp.lt.s32.totalorder %s14, 1
        %s257 = scalar_select %p256, %s14, 1
        %s258 = smul.addr %s257, 2
        %s259 = smul.addr %s258, 4
        %s260 = scalar_lea.vmem %s0, %s259
      $region48: #{tpu_custom_call.1} parent=43 // pred_fallthru
        _
    $region44: #{tpu_custom_call.1} parent=5 // pred_fallthru
      _
    %p261 = scmp.le.s32.totalorder 1, %s14
    %p262 = scmp.lt.s32.totalorder %s14, 3
    %p263 = pnand %p261, %p262
    %p264 = pneg %p263
    // Predicated region
    $region49: #{tpu_custom_call.1} parent=5 // pred_check
      _
    $region50: #{tpu_custom_call.1} parent=5 // pred_check_branch
      %266 = sbr.rel (%p263) target = $region52
    $region51: #{tpu_custom_call.1} parent=5 // pred_region
      %s267 = ssub.s32 %s14, 1
      %p268 = scmp.lt.s32.totalorder %s19, 1
      %s269 = scalar_select %p268, %s19, 1
      %s270 = smul.addr %s269, 2
      %s271 = smul.addr %s270, 4
      %s272 = scalar_lea.vmem %s0, %s271
      %p273 = pneg %p40
      %p274 = pneg %p37
      %p275 = pneg %p61
      %p276 = pneg %p58
      %p277 = pneg %p82
      %p278 = pneg %p79
      %p279 = pneg %p103
      %p280 = pneg %p100
      %p281 = pneg %p124
      %p282 = pneg %p121
      %p283 = pneg %p145
      %p284 = pneg %p142
      %p285 = pneg %p166
      %p286 = pneg %p163
      %p287 = pneg %p187
      %p288 = pneg %p184
      %p289 = pneg %p213
      %p290 = pneg %p210
      %p291 = scmp.lt.s32.totalorder %s19, 1
      %s292 = scalar_select %p291, %s19, 1
      %s293 = smul.addr %s292, 4
      %s294 = smul.addr %s293, 8
      %s295 = scalar_lea.vmem %s8, %s294
      %p296 = scmp.lt.s32.totalorder %s19, 1
      %s297 = scalar_select %p296, %s19, 1
      %s298 = smul.addr %s297, 2
      %s299 = smul.addr %s298, 4
      %s300 = scalar_lea.vmem %s0, %s299
      %p301 = scmp.lt.s32.totalorder %s19, 1
      %s302 = scalar_select %p301, %s19, 1
      %s303 = smul.addr %s302, 4
      %s304 = smul.addr %s303, 8
      %s305 = scalar_lea.vmem %s8, %s304
      %v307 = vld [vmem:[%s6] sm:$0x1]
      %v308 = vld [vmem:[%s5] sm:$0xff]
      %v309 = vld [vmem:[%s5 + $0x8] sm:$0xff]
      %v310 = vld [vmem:[%s5 + $0x10] sm:$0xff]
      %v311 = vld [vmem:[%s5 + $0x18] sm:$0xff]
      %v312 = vld [vmem:[%s300] sm:$0xf]
      %v313 = vld [vmem:[%s300 + $0x4] sm:$0xf]
      %v316 = vunpack.c.l.b16 %v312
      %v317 = vunpack.c.l.b16 %v313
      %v318 = vpack.c.b16 %v317, %v316
      %319 = vrot.lane.b32.xlu0 %v318, 1
      %v320 = vpop.permute.xlu0 %319
      %vm321 = vcmask 7168
      %v324 = vsel %vm321, 0, %v320
      %vm325 = vcmask 138240
      %v326 = vsel %vm325, %v324, 0
      %v329 = vpack.i.b16 %v307, %v307
      %v331 = vlaneseq
      %v332 = vshrl.u32 %v331, 7
      %v333 = vsub.s32 0, %v332
      %v334 = vrot.slane %v329, %v333
      %v335 = vmul.bf16 %v326, %v334
      %v336 = vshrl.u32 %v307, 16
      %v337 = vpack.i.b16 %v336, %v336
      %v339 = vlaneseq
      %v340 = vshrl.u32 %v339, 7
      %v341 = vsub.s32 0, %v340
      %v342 = vrot.slane %v337, %v341
      %344 = vrot.lane.b32.xlu0 %v342, 2
      %v345 = vpop.permute.xlu0 %344
      %v347 = vmul.bf16 %v326, %v345
      %350 = vrot.lane.b32.xlu0 %v347, 126
      %v351 = vpop.permute.xlu0 %350
      %v353 = vld [vmem:[%s1] sm:$0xf]
      %v354 = vld [vmem:[%s1 + $0x4] sm:$0xf]
      %v355 = vld [vmem:[%s1 + $0x8] sm:$0xf]
      %v356 = vld [vmem:[%s1 + $0xc] sm:$0xf]
      %v357 = vld [vmem:[%s1 + $0x10] sm:$0xf]
      %v358 = vld [vmem:[%s1 + $0x14] sm:$0xf]
      %v359 = vld [vmem:[%s1 + $0x18] sm:$0xf]
      %v360 = vld [vmem:[%s1 + $0x1c] sm:$0xf]
      %v369 = vunpack.c.l.b16 %v353
      %v370 = vunpack.c.l.b16 %v354
      %v371 = vunpack.c.l.b16 %v355
      %v372 = vunpack.c.l.b16 %v356
      %v373 = vunpack.c.l.b16 %v357
      %v374 = vunpack.c.l.b16 %v358
      %v375 = vunpack.c.l.b16 %v359
      %v376 = vunpack.c.l.b16 %v360
      %v377 = vpack.c.b16 %v370, %v369
      %v378 = vpack.c.b16 %v372, %v371
      %v379 = vpack.c.b16 %v374, %v373
      %v380 = vpack.c.b16 %v376, %v375
      %vm381 = vcmask 392192
      %v383 = vsel %vm381, %v377, 0
      %v386 = vsel %vm381, %v378, 0
      %v389 = vsel %vm381, %v379, 0
      %v392 = vsel %vm381, %v380, 0
      %394 = vmatprep.subr.bf16.mxu0 0
      %395 = vmatpush1.bf16.msra.mxu0 %v335
      %396 = vmatprep.subr.bf16.mxu0 0
      %397 = vmatpush1.bf16.msra.mxu0 %v318
      %398 = vmatprep.subr.bf16.mxu0 0
      %399 = vmatpush1.bf16.msra.mxu0 %v351
      %400 = vmatprep.subr.bf16.mxu0 0
      %401 = vmatpush1.bf16.msra.mxu0 0
      %402 = vmatprep.subr.bf16.mxu0 0
      %403 = vmatpush1.bf16.msra.mxu0 0
      %404 = vmatprep.subr.bf16.mxu0 0
      %405 = vmatpush1.bf16.msra.mxu0 0
      %406 = vmatprep.subr.bf16.mxu0 0
      %407 = vmatpush1.bf16.msra.mxu0 0
      %408 = vmatprep.subr.bf16.mxu0 0
      %409 = vmatpush1.bf16.msra.mxu0 0
      %410 = vmatprep.subr.bf16.mxu0 0
      %411 = vmatpush1.bf16.msra.mxu0 0
      %412 = vmatprep.subr.bf16.mxu0 0
      %413 = vmatpush1.bf16.msra.mxu0 0
      %414 = vmatprep.subr.bf16.mxu0 0
      %415 = vmatpush1.bf16.msra.mxu0 0
      %416 = vmatprep.subr.bf16.mxu0 0
      %417 = vmatpush1.bf16.msra.mxu0 0
      %418 = vmatprep.subr.bf16.mxu0 0
      %419 = vmatpush1.bf16.msra.mxu0 0
      %420 = vmatprep.subr.bf16.mxu0 0
      %421 = vmatpush1.bf16.msra.mxu0 0
      %422 = vmatprep.subr.bf16.mxu0 0
      %423 = vmatpush1.bf16.msra.mxu0 0
      %424 = vmatprep.subr.bf16.mxu0 0
      %425 = vmatpush1.bf16.msra.mxu0 0
      %426 = vmatprep.mubr.bf16.mxu0 0
      %427 = vmatmul.mubr.bf16.gmra.mrb[0].mxu0 %v383
      %v428 = vpop.f32.mrb[0].mxu0
      %v429 = vadd.f32 0.0, %v428
      %v430 = vpop.f32.mrb[0].mxu0
      %v431 = vpop.f32.mrb[0].mxu0
      %v432 = vadd.f32 0.0, %v431
      %v433 = vpop.f32.mrb[0].mxu0
      %434 = vmatprep.mubr.bf16.mxu0 0
      %435 = vmatmul.mubr.bf16.gmra.mrb[0].mxu0 %v386
      %v436 = vpop.f32.mrb[0].mxu0
      %v437 = vadd.f32 0.0, %v436
      %v438 = vpop.f32.mrb[0].mxu0
      %v439 = vpop.f32.mrb[0].mxu0
      %v440 = vadd.f32 0.0, %v439
      %v441 = vpop.f32.mrb[0].mxu0
      %442 = vmatprep.mubr.bf16.mxu0 0
      %443 = vmatmul.mubr.bf16.gmra.mrb[0].mxu0 %v389
      %v444 = vpop.f32.mrb[0].mxu0
      %v445 = vadd.f32 0.0, %v444
      %v446 = vpop.f32.mrb[0].mxu0
      %v447 = vpop.f32.mrb[0].mxu0
      %v448 = vadd.f32 0.0, %v447
      %v449 = vpop.f32.mrb[0].mxu0
      %450 = vmatprep.mubr.bf16.mxu0 0
      %451 = vmatmul.mubr.bf16.gmra.mrb[0].mxu0 %v392
      %v452 = vpop.f32.mrb[0].mxu0
      %v453 = vadd.f32 0.0, %v452
      %v454 = vpop.f32.mrb[0].mxu0
      %v455 = vpop.f32.mrb[0].mxu0
      %v456 = vadd.f32 0.0, %v455
      %v457 = vpop.f32.mrb[0].mxu0
      %458 = vdwg.mxu0
      %460 = vset.pattern.permute.xlu0 4
      %461 = vperm.xlu0 %460, %v308
      %v462 = vpop.permute.xlu0 %461
      %465 = vset.pattern.permute.xlu0 4
      %466 = vperm.xlu0 %465, %v309
      %v467 = vpop.permute.xlu0 %466
      %470 = vset.pattern.permute.xlu0 4
      %471 = vperm.xlu0 %470, %v310
      %v472 = vpop.permute.xlu0 %471
      %475 = vset.pattern.permute.xlu0 4
      %476 = vperm.xlu0 %475, %v311
      %v477 = vpop.permute.xlu0 %476
      %v479 = vmul.f32 %v445, %v462
      %v480 = vmul.f32 %v448, %v467
      %v481 = vmul.f32 %v453, %v472
      %v482 = vmul.f32 %v456, %v477
      %483 = vset.pattern.permute.xlu0 5
      %484 = vperm.xlu0 %483, %v308
      %v485 = vpop.permute.xlu0 %484
      %487 = vset.pattern.permute.xlu0 5
      %488 = vperm.xlu0 %487, %v309
      %v489 = vpop.permute.xlu0 %488
      %491 = vset.pattern.permute.xlu0 5
      %492 = vperm.xlu0 %491, %v310
      %v493 = vpop.permute.xlu0 %492
      %495 = vset.pattern.permute.xlu0 5
      %496 = vperm.xlu0 %495, %v311
      %v497 = vpop.permute.xlu0 %496
      %v499 = vadd.f32 %v479, %v485
      %v500 = vadd.f32 %v480, %v489
      %v501 = vadd.f32 %v481, %v493
      %v502 = vadd.f32 %v482, %v497
      %503 = vset.pattern.permute.xlu0 0
      %504 = vperm.xlu0 %503, %v308
      %v505 = vpop.permute.xlu0 %504
      %507 = vset.pattern.permute.xlu0 0
      %508 = vperm.xlu0 %507, %v309
      %v509 = vpop.permute.xlu0 %508
      %511 = vset.pattern.permute.xlu0 0
      %512 = vperm.xlu0 %511, %v310
      %v513 = vpop.permute.xlu0 %512
      %515 = vset.pattern.permute.xlu0 0
      %516 = vperm.xlu0 %515, %v311
      %v517 = vpop.permute.xlu0 %516
      %v519 = vmul.f32 %v429, %v505
      %v520 = vmul.f32 %v432, %v509
      %v521 = vmul.f32 %v437, %v513
      %v522 = vmul.f32 %v440, %v517
      %523 = vset.pattern.permute.xlu0 1
      %524 = vperm.xlu0 %523, %v308
      %v525 = vpop.permute.xlu0 %524
      %527 = vset.pattern.permute.xlu0 1
      %528 = vperm.xlu0 %527, %v309
      %v529 = vpop.permute.xlu0 %528
      %531 = vset.pattern.permute.xlu0 1
      %532 = vperm.xlu0 %531, %v310
      %v533 = vpop.permute.xlu0 %532
      %535 = vset.pattern.permute.xlu0 1
      %536 = vperm.xlu0 %535, %v311
      %v537 = vpop.permute.xlu0 %536
      %v539 = vadd.f32 %v519, %v525
      %v540 = vadd.f32 %v520, %v529
      %v541 = vadd.f32 %v521, %v533
      %v542 = vadd.f32 %v522, %v537
      %v543 = vmax.f32 %v539, 0.0
      %v544 = vmax.f32 %v540, 0.0
      %v545 = vmax.f32 %v541, 0.0
      %v546 = vmax.f32 %v542, 0.0
      %v547 = vpack.c.bf16 %v544, %v543
      %v548 = vpack.c.bf16 %v546, %v545
      %551 = vrot.lane.b32.xlu0 %v547, 1
      %v552 = vpop.permute.xlu0 %551
      %553 = vrot.lane.b32.xlu0 %v548, 1
      %v554 = vpop.permute.xlu0 %553
      %v556 = vsel %vm321, 0, %v552
      %v558 = vsel %vm321, 0, %v554
      %v559 = vsel %vm325, %v556, 0
      %v561 = vsel %vm325, %v558, 0
      %v563 = vmul.bf16 %v559, %v334
      %v564 = vmul.bf16 %v561, %v334
      %v565 = vmul.bf16 %v559, %v345
      %v566 = vmul.bf16 %v561, %v345
      %569 = vrot.lane.b32.xlu0 %v565, 126
      %v570 = vpop.permute.xlu0 %569
      %571 = vrot.lane.b32.xlu0 %v566, 126
      %v572 = vpop.permute.xlu0 %571
      %v575 = vld [vmem:[%s2] sm:$0xf]
      %v576 = vld [vmem:[%s2 + $0x4] sm:$0xf]
      %v577 = vld [vmem:[%s2 + $0x8] sm:$0xf]
      %v578 = vld [vmem:[%s2 + $0xc] sm:$0xf]
      %v583 = vunpack.c.l.b16 %v575
      %v584 = vunpack.c.l.b16 %v576
      %v585 = vunpack.c.l.b16 %v577
      %v586 = vunpack.c.l.b16 %v578
      %v587 = vpack.c.b16 %v584, %v583
      %v588 = vpack.c.b16 %v586, %v585
      %vm589 = vcmask 785408
      %v591 = vsel %vm589, %v587, 0
      %v594 = vsel %vm589, %v588, 0
      %596 = vmatprep.subr.bf16.mxu0 0
      %597 = vmatpush1.bf16.msra.mxu0 %v563
      %598 = vmatprep.subr.bf16.mxu0 0
      %599 = vmatpush1.bf16.msra.mxu0 %v564
      %600 = vmatprep.subr.bf16.mxu0 0
      %601 = vmatpush1.bf16.msra.mxu0 %v547
      %602 = vmatprep.subr.bf16.mxu0 0
      %603 = vmatpush1.bf16.msra.mxu0 %v548
      %604 = vmatprep.subr.bf16.mxu0 0
      %605 = vmatpush1.bf16.msra.mxu0 %v570
      %606 = vmatprep.subr.bf16.mxu0 0
      %607 = vmatpush1.bf16.msra.mxu0 %v572
      %608 = vmatprep.subr.bf16.mxu0 0
      %609 = vmatpush1.bf16.msra.mxu0 0
      %610 = vmatprep.subr.bf16.mxu0 0
      %611 = vmatpush1.bf16.msra.mxu0 0
      %612 = vmatprep.subr.bf16.mxu0 0
      %613 = vmatpush1.bf16.msra.mxu0 0
      %614 = vmatprep.subr.bf16.mxu0 0
      %615 = vmatpush1.bf16.msra.mxu0 0
      %616 = vmatprep.subr.bf16.mxu0 0
      %617 = vmatpush1.bf16.msra.mxu0 0
      %618 = vmatprep.subr.bf16.mxu0 0
      %619 = vmatpush1.bf16.msra.mxu0 0
      %620 = vmatprep.subr.bf16.mxu0 0
      %621 = vmatpush1.bf16.msra.mxu0 0
      %622 = vmatprep.subr.bf16.mxu0 0
      %623 = vmatpush1.bf16.msra.mxu0 0
      %624 = vmatprep.subr.bf16.mxu0 0
      %625 = vmatpush1.bf16.msra.mxu0 0
      %626 = vmatprep.subr.bf16.mxu0 0
      %627 = vmatpush1.bf16.msra.mxu0 0
      %628 = vmatprep.mubr.bf16.mxu0 0
      %629 = vmatmul.mubr.bf16.gmra.mrb[0].mxu0 %v591
      %v630 = vpop.f32.mrb[0].mxu0
      %v631 = vadd.f32 0.0, %v630
      %v632 = vpop.f32.mrb[0].mxu0
      %v633 = vpop.f32.mrb[0].mxu0
      %v634 = vadd.f32 0.0, %v633
      %v635 = vpop.f32.mrb[0].mxu0
      %636 = vmatprep.mubr.bf16.mxu0 0
      %637 = vmatmul.mubr.bf16.gmra.mrb[0].mxu0 %v594
      %v638 = vpop.f32.mrb[0].mxu0
      %v639 = vadd.f32 0.0, %v638
      %v640 = vpop.f32.mrb[0].mxu0
      %v641 = vpop.f32.mrb[0].mxu0
      %v642 = vadd.f32 0.0, %v641
      %v643 = vpop.f32.mrb[0].mxu0
      %644 = vdwg.mxu0
      %645 = vset.pattern.permute.xlu0 2
      %646 = vperm.xlu0 %645, %v308
      %v647 = vpop.permute.xlu0 %646
      %649 = vset.pattern.permute.xlu0 2
      %650 = vperm.xlu0 %649, %v309
      %v651 = vpop.permute.xlu0 %650
      %653 = vset.pattern.permute.xlu0 2
      %654 = vperm.xlu0 %653, %v310
      %v655 = vpop.permute.xlu0 %654
      %657 = vset.pattern.permute.xlu0 2
      %658 = vperm.xlu0 %657, %v311
      %v659 = vpop.permute.xlu0 %658
      %v661 = vmul.f32 %v631, %v647
      %v662 = vmul.f32 %v634, %v651
      %v663 = vmul.f32 %v639, %v655
      %v664 = vmul.f32 %v642, %v659
      %665 = vset.pattern.permute.xlu0 3
      %666 = vperm.xlu0 %665, %v308
      %v667 = vpop.permute.xlu0 %666
      %669 = vset.pattern.permute.xlu0 3
      %670 = vperm.xlu0 %669, %v309
      %v671 = vpop.permute.xlu0 %670
      %673 = vset.pattern.permute.xlu0 3
      %674 = vperm.xlu0 %673, %v310
      %v675 = vpop.permute.xlu0 %674
      %677 = vset.pattern.permute.xlu0 3
      %678 = vperm.xlu0 %677, %v311
      %v679 = vpop.permute.xlu0 %678
      %v681 = vadd.f32 %v661, %v667
      %v682 = vadd.f32 %v662, %v671
      %v683 = vadd.f32 %v663, %v675
      %v684 = vadd.f32 %v664, %v679
      %v685 = vpack.c.bf16 %v682, %v681
      %v686 = vpack.c.bf16 %v684, %v683
      %v687 = vld [vmem:[%s7] sm:$0xf]
      %v688 = vld [vmem:[%s7 + $0x4] sm:$0xf]
      %v691 = vunpack.c.l.b16 %v687
      %v692 = vunpack.c.l.b16 %v688
      %v693 = vpack.c.b16 %v692, %v691
      %vm695 = vcmask 130048
      %v697 = vsel %vm695, %v685, 0
      %v700 = vsel %vm695, %v686, 0
      %702 = vmatprep.subr.bf16.mxu0 0
      %703 = vmatpush1.bf16.msra.mxu0 %v693
      %704 = vmatprep.subr.bf16.mxu0 0
      %705 = vmatpush1.bf16.msra.mxu0 0
      %706 = vmatprep.subr.bf16.mxu0 0
      %707 = vmatpush1.bf16.msra.mxu0 0
      %708 = vmatprep.subr.bf16.mxu0 0
      %709 = vmatpush1.bf16.msra.mxu0 0
      %710 = vmatprep.subr.bf16.mxu0 0
      %711 = vmatpush1.bf16.msra.mxu0 0
      %712 = vmatprep.subr.bf16.mxu0 0
      %713 = vmatpush1.bf16.msra.mxu0 0
      %714 = vmatprep.subr.bf16.mxu0 0
      %715 = vmatpush1.bf16.msra.mxu0 0
      %716 = vmatprep.subr.bf16.mxu0 0
      %717 = vmatpush1.bf16.msra.mxu0 0
      %718 = vmatprep.subr.bf16.mxu0 0
      %719 = vmatpush1.bf16.msra.mxu0 0
      %720 = vmatprep.subr.bf16.mxu0 0
      %721 = vmatpush1.bf16.msra.mxu0 0
      %722 = vmatprep.subr.bf16.mxu0 0
      %723 = vmatpush1.bf16.msra.mxu0 0
      %724 = vmatprep.subr.bf16.mxu0 0
      %725 = vmatpush1.bf16.msra.mxu0 0
      %726 = vmatprep.subr.bf16.mxu0 0
      %727 = vmatpush1.bf16.msra.mxu0 0
      %728 = vmatprep.subr.bf16.mxu0 0
      %729 = vmatpush1.bf16.msra.mxu0 0
      %730 = vmatprep.subr.bf16.mxu0 0
      %731 = vmatpush1.bf16.msra.mxu0 0
      %732 = vmatprep.subr.bf16.mxu0 0
      %733 = vmatpush1.bf16.msra.mxu0 0
      %734 = vmatprep.mubr.bf16.mxu0 0
      %735 = vmatmul.mubr.bf16.gmra.mrb[0].mxu0 %v697
      %v736 = vpop.f32.mrb[0].mxu0
      %v737 = vadd.f32 0.0, %v736
      %v738 = vpop.f32.mrb[0].mxu0
      %v739 = vpop.f32.mrb[0].mxu0
      %v740 = vadd.f32 0.0, %v739
      %v741 = vpop.f32.mrb[0].mxu0
      %742 = vmatprep.mubr.bf16.mxu0 0
      %743 = vmatmul.mubr.bf16.gmra.mrb[0].mxu0 %v700
      %v744 = vpop.f32.mrb[0].mxu0
      %v745 = vadd.f32 0.0, %v744
      %v746 = vpop.f32.mrb[0].mxu0
      %v747 = vpop.f32.mrb[0].mxu0
      %v748 = vadd.f32 0.0, %v747
      %v749 = vpop.f32.mrb[0].mxu0
      %750 = vdwg.mxu0
      %v751 = vld [vmem:[%s3] sm:$0x1]
      %v752 = vpack.c.bf16 %v740, %v737
      %v753 = vpack.c.bf16 %v748, %v745
      %vm754 = vcmask 261120
      %v756 = vsel %vm754, %v751, 0
      %758 = vmatprep.subr.bf16.mxu0 0
      %759 = vmatpush1.bf16.msra.mxu0 %v752
      %760 = vmatprep.subr.bf16.mxu0 0
      %761 = vmatpush1.bf16.msra.mxu0 %v753
      %762 = vmatprep.subr.bf16.mxu0 0
      %763 = vmatpush1.bf16.msra.mxu0 0
      %764 = vmatprep.subr.bf16.mxu0 0
      %765 = vmatpush1.bf16.msra.mxu0 0
      %766 = vmatprep.subr.bf16.mxu0 0
      %767 = vmatpush1.bf16.msra.mxu0 0
      %768 = vmatprep.subr.bf16.mxu0 0
      %769 = vmatpush1.bf16.msra.mxu0 0
      %770 = vmatprep.subr.bf16.mxu0 0
      %771 = vmatpush1.bf16.msra.mxu0 0
      %772 = vmatprep.subr.bf16.mxu0 0
      %773 = vmatpush1.bf16.msra.mxu0 0
      %774 = vmatprep.subr.bf16.mxu0 0
      %775 = vmatpush1.bf16.msra.mxu0 0
      %776 = vmatprep.subr.bf16.mxu0 0
      %777 = vmatpush1.bf16.msra.mxu0 0
      %778 = vmatprep.subr.bf16.mxu0 0
      %779 = vmatpush1.bf16.msra.mxu0 0
      %780 = vmatprep.subr.bf16.mxu0 0
      %781 = vmatpush1.bf16.msra.mxu0 0
      %782 = vmatprep.subr.bf16.mxu0 0
      %783 = vmatpush1.bf16.msra.mxu0 0
      %784 = vmatprep.subr.bf16.mxu0 0
      %785 = vmatpush1.bf16.msra.mxu0 0
      %786 = vmatprep.subr.bf16.mxu0 0
      %787 = vmatpush1.bf16.msra.mxu0 0
      %788 = vmatprep.subr.bf16.mxu0 0
      %789 = vmatpush1.bf16.msra.mxu0 0
      %790 = vmatprep.mubr.bf16.mxu0 0
      %791 = vmatmul.mubr.bf16.gmra.mrb[0].mxu0 %v756
      %v792 = vpop.f32.mrb[0].mxu0
      %v793 = vadd.f32 0.0, %v792
      %v794 = vpop.f32.mrb[0].mxu0
      %v795 = vpop.f32.mrb[0].mxu0
      %v796 = vpop.f32.mrb[0].mxu0
      %797 = vdwg.mxu0
      %v798 = vmax.f32 %v793, 0.0
      %v799 = vld [vmem:[%s4] sm:$0xf]
      %v800 = vld [vmem:[%s4 + $0x4] sm:$0xf]
      %v801 = vld [vmem:[%s4 + $0x8] sm:$0xf]
      %v802 = vld [vmem:[%s4 + $0xc] sm:$0xf]
      %v803 = vpack.c.bf16 %v798, %v798
      %v808 = vunpack.c.l.b16 %v799
      %v809 = vunpack.c.l.b16 %v800
      %v810 = vunpack.c.l.b16 %v801
      %v811 = vunpack.c.l.b16 %v802
      %v812 = vpack.c.b16 %v809, %v808
      %v813 = vpack.c.b16 %v811, %v810
      %vm814 = vcmask 15360
      %v816 = vsel %vm814, %v812, 0
      %v819 = vsel %vm814, %v813, 0
      %vm821 = vcmask 1040384
      %v823 = vsel %vm821, %v803, 0
      %825 = vmatprep.subr.bf16.mxu0 0
      %826 = vmatpush1.bf16.msra.mxu0 %v823
      %827 = vmatprep.subr.bf16.mxu0 0
      %828 = vmatpush1.bf16.msra.mxu0 0
      %829 = vmatprep.subr.bf16.mxu0 0
      %830 = vmatpush1.bf16.msra.mxu0 0
      %831 = vmatprep.subr.bf16.mxu0 0
      %832 = vmatpush1.bf16.msra.mxu0 0
      %833 = vmatprep.subr.bf16.mxu0 0
      %834 = vmatpush1.bf16.msra.mxu0 0
      %835 = vmatprep.subr.bf16.mxu0 0
      %836 = vmatpush1.bf16.msra.mxu0 0
      %837 = vmatprep.subr.bf16.mxu0 0
      %838 = vmatpush1.bf16.msra.mxu0 0
      %839 = vmatprep.subr.bf16.mxu0 0
      %840 = vmatpush1.bf16.msra.mxu0 0
      %841 = vmatprep.subr.bf16.mxu0 0
      %842 = vmatpush1.bf16.msra.mxu0 0
      %843 = vmatprep.subr.bf16.mxu0 0
      %844 = vmatpush1.bf16.msra.mxu0 0
      %845 = vmatprep.subr.bf16.mxu0 0
      %846 = vmatpush1.bf16.msra.mxu0 0
      %847 = vmatprep.subr.bf16.mxu0 0
      %848 = vmatpush1.bf16.msra.mxu0 0
      %849 = vmatprep.subr.bf16.mxu0 0
      %850 = vmatpush1.bf16.msra.mxu0 0
      %851 = vmatprep.subr.bf16.mxu0 0
      %852 = vmatpush1.bf16.msra.mxu0 0
      %853 = vmatprep.subr.bf16.mxu0 0
      %854 = vmatpush1.bf16.msra.mxu0 0
      %855 = vmatprep.subr.bf16.mxu0 0
      %856 = vmatpush1.bf16.msra.mxu0 0
      %857 = vmatprep.mubr.bf16.mxu0 0
      %858 = vmatmul.mubr.bf16.gmra.mrb[0].mxu0 %v816
      %v859 = vpop.f32.mrb[0].mxu0
      %v860 = vadd.f32 0.0, %v859
      %v861 = vpop.f32.mrb[0].mxu0
      %v862 = vpop.f32.mrb[0].mxu0
      %v863 = vadd.f32 0.0, %v862
      %v864 = vpop.f32.mrb[0].mxu0
      %865 = vmatprep.mubr.bf16.mxu0 0
      %866 = vmatmul.mubr.bf16.gmra.mrb[0].mxu0 %v819
      %v867 = vpop.f32.mrb[0].mxu0
      %v868 = vadd.f32 0.0, %v867
      %v869 = vpop.f32.mrb[0].mxu0
      %v870 = vpop.f32.mrb[0].mxu0
      %v871 = vadd.f32 0.0, %v870
      %v872 = vpop.f32.mrb[0].mxu0
      %873 = vdwg.mxu0
      %v874 = vxor.u32 %v860, 2147483648
      %v875 = vxor.u32 %v863, 2147483648
      %v876 = vxor.u32 %v868, 2147483648
      %v877 = vxor.u32 %v871, 2147483648
      %v878 = vmul.f32 %v874, 1.442695
      %v879 = vpow.pop %v878
      %v880 = vmul.f32 %v875, 1.442695
      %v881 = vpow.pop %v880
      %v882 = vmul.f32 %v876, 1.442695
      %v883 = vpow.pop %v882
      %v884 = vmul.f32 %v877, 1.442695
      %v885 = vpow.pop %v884
      %v886 = vadd.f32 %v879, 1.0
      %v887 = vadd.f32 %v881, 1.0
      %v888 = vadd.f32 %v883, 1.0
      %v889 = vadd.f32 %v885, 1.0
      %v890 = vrcp.pop %v886
      %v891 = vmul.f32 1.0, %v890
      %v892 = vrcp.pop %v887
      %v893 = vmul.f32 1.0, %v892
      %v894 = vrcp.pop %v888
      %v895 = vmul.f32 1.0, %v894
      %v896 = vrcp.pop %v889
      %v897 = vmul.f32 1.0, %v896
      %899 = vset.pattern.permute.xlu0 0
      %900 = vperm.xlu0 %899, %v891
      %v901 = vpop.permute.xlu0 %900
      %904 = vset.pattern.permute.xlu0 0
      %905 = vperm.xlu0 %904, %v893
      %v906 = vpop.permute.xlu0 %905
      %909 = vset.pattern.permute.xlu0 0
      %910 = vperm.xlu0 %909, %v895
      %v911 = vpop.permute.xlu0 %910
      %914 = vset.pattern.permute.xlu0 0
      %915 = vperm.xlu0 %914, %v897
      %v916 = vpop.permute.xlu0 %915
      %v918 = vmul.f32 %v681, %v901
      %v919 = vmul.f32 %v682, %v906
      %v920 = vmul.f32 %v683, %v911
      %v921 = vmul.f32 %v684, %v916
      %v922 = vadd.f32 %v918, %v499
      %v923 = vadd.f32 %v919, %v500
      %v924 = vadd.f32 %v920, %v501
      %v925 = vadd.f32 %v921, %v502
      %v926 = vmax.f32 %v922, 0.0
      %v927 = vmax.f32 %v923, 0.0
      %v928 = vmax.f32 %v924, 0.0
      %v929 = vmax.f32 %v925, 0.0
      %930 = vst.msk [vmem:[%s305] sm:$0xff] %vm695, %v926
      %931 = vst.msk [vmem:[%s305 + $0x8] sm:$0xff] %vm695, %v927
      %932 = vst.msk [vmem:[%s305 + $0x10] sm:$0xff] %vm695, %v928
      %933 = vst.msk [vmem:[%s305 + $0x18] sm:$0xff] %vm695, %v929
      %p934 = scmp.lt.s32.totalorder %s19, 1
      %s935 = scalar_select %p934, %s19, 1
      %s936 = smul.addr %s935, 4
      %s937 = smul.addr %s936, 8
      %s938 = scalar_lea.vmem %s8, %s937
      // Predicated region
      $region53: #{tpu_custom_call.1} parent=51 // pred_check
        %p939 = pneg %p210
      $region54: #{tpu_custom_call.1} parent=51 // pred_check_branch
        %941 = sbr.rel (%p939) target = $region56
      $region55: #{tpu_custom_call.1} parent=51 // pred_region
        _
      $region56: #{tpu_custom_call.1} parent=51 // pred_fallthru
        _
    $region52: #{tpu_custom_call.1} parent=5 // pred_fallthru
      _
    %p942 = scmp.le.s32.totalorder 2, %s14
    // Predicated region
    $region57: #{tpu_custom_call.1} parent=5 // pred_check
      %p943 = pneg %p942
    $region58: #{tpu_custom_call.1} parent=5 // pred_check_branch
      %945 = sbr.rel (%p943) target = $region60
    $region59: #{tpu_custom_call.1} parent=5 // pred_region
      %s946 = ssub.s32 %s14, 2
      // Predicated region
      $region61: #{tpu_custom_call.1} parent=59 // pred_check
        %p947 = pneg %p216
      $region62: #{tpu_custom_call.1} parent=59 // pred_check_branch
        %949 = sbr.rel (%p947) target = $region64
      $region63: #{tpu_custom_call.1} parent=59 // pred_region
        %p950 = scmp.lt.s32.totalorder %s20, 1
        %s951 = scalar_select %p950, %s20, 1
        %s952 = smul.addr %s951, 4
        %s953 = smul.addr %s952, 8
        %s954 = scalar_lea.vmem %s8, %s953
      $region64: #{tpu_custom_call.1} parent=59 // pred_fallthru
        _
    $region60: #{tpu_custom_call.1} parent=5 // pred_fallthru
      _
  $region6: #{tpu_custom_call.1} parent=0 // loop_footer
    %s18 = sadd.s32 1, %s14
  $region7: #{tpu_custom_call.1} parent=0 // loop_footer_branch
    %13 = sbr.rel target = $region3
  $region8: #{tpu_custom_call.1} parent=0 // loop_exit
    _

</llo_original>
